<compile_context>
chip_gen: v5e
topology: v5e:2x2
jax: 0.10.0
libtpu: 0.0.40
codegen_flags: <defaults>
</compile_context>

<pallas_src>
import functools
import math

import jax
import jax.numpy as jnp
from jax.experimental import pallas as pl
from jax.experimental.pallas import tpu as pltpu


_BLOCK_TARGET_BYTES = 4 * 1024 * 1024   # padded bytes per x-in/out block
_VMEM_LIMIT_BYTES = 40 * 1024 * 1024    # 4 live blocks + ~3 pe-sized temps fit


def _round_up(n, m):
    return ((n + m - 1) // m) * m


def _sublane_multiple(dtype):
    return {4: 8, 2: 16, 1: 32}.get(jnp.dtype(dtype).itemsize, 8)


def _pos_enc_kernel(inv_freq_ref, odd_ref, x_ref, o_ref, *, tile_s):
    # x_ref / o_ref: (tile_s, tile_b, D) block of the (S, B, D) array.
    # inv_freq_ref / odd_ref: (1, 1, D) f32, VMEM-resident across the grid.
    s0 = pl.program_id(0) * tile_s
    pos = (s0 + jax.lax.broadcasted_iota(jnp.int32, (tile_s, 1, 1), 0)
           ).astype(jnp.float32)
    angle = pos * inv_freq_ref[...]                        # (tile_s, 1, D) f32
    # Explicit sin/cos select: both transcendentals sit in the otherwise-idle
    # EUP slot, and the result matches the reference exactly (no sin(x+pi/2)
    # drift at large positions).
    pe = jnp.where(odd_ref[...] > 0.5, jnp.cos(angle), jnp.sin(angle))
    o_ref[...] = x_ref[...] + pe.astype(x_ref.dtype)       # broadcasts over B


def positional_encoding(x, max_len=5000, donate=False):
    """x: (seq_len, batch, d_model) float array. Returns x + PE[:seq_len]."""
    S, B, D = x.shape
    if S > max_len:
        raise ValueError("sequence length exceeds max_len")

    itemsize = jnp.dtype(x.dtype).itemsize
    sub = _sublane_multiple(x.dtype)

    # --- Tile selection against the PADDED VMEM footprint ---------------------
    padded_b = _round_up(B, sub)
    row_bytes = padded_b * D * itemsize          # one seq position, full batch

    if row_bytes <= _BLOCK_TARGET_BYTES:
        tile_b = B                               # full batch per block
        tile_s = max(1, min(S, _BLOCK_TARGET_BYTES // row_bytes))
        if S >= 2:                               # >=2 seq tiles for v7x's 2 TCs
            tile_s = min(tile_s, pl.cdiv(S, 2))
    else:
        # A single (1, B, D) row already exceeds the target: tile the batch axis
        # with a sublane-multiple tile width (legal block shape, bounded VMEM).
        tile_s = 1
        tile_b = (_BLOCK_TARGET_BYTES // (D * itemsize)) // sub * sub
        tile_b = max(sub, tile_b)
        if tile_b >= B:
            tile_b = B

    grid = (pl.cdiv(S, tile_s), pl.cdiv(B, tile_b))

    # --- Hoisted feature-only vectors (computed once on host) -----------------
    d_idx = jnp.arange(D, dtype=jnp.int32)
    inv_freq = jnp.exp(((d_idx // 2) * 2).astype(jnp.float32)
                       * (-math.log(10000.0) / D)).reshape(1, 1, D)
    odd = (d_idx % 2).astype(jnp.float32).reshape(1, 1, D)

    x_block = (tile_s, tile_b, D)
    feat_spec = pl.BlockSpec((1, 1, D), lambda i, j: (0, 0, 0))
    kernel = functools.partial(_pos_enc_kernel, tile_s=tile_s)

    # TODO(synk): for d_model not a multiple of 128 the output stores are masked
    # (vst.msk); a lane-dense (S, B*D) reshape would need lane-indexed pe and is
    # left out since typical d_model is a multiple of 128.

    return pl.pallas_call(
        kernel,
        out_shape=jax.ShapeDtypeStruct((S, B, D), x.dtype),
        grid=grid,
        in_specs=[feat_spec, feat_spec,
                  pl.BlockSpec(x_block, lambda i, j: (i, j, 0))],
        out_specs=pl.BlockSpec(x_block, lambda i, j: (i, j, 0)),
        input_output_aliases=({2: 0} if donate else {}),
        compiler_params=pltpu.CompilerParams(
            dimension_semantics=("parallel", "parallel"),
            vmem_limit_bytes=_VMEM_LIMIT_BYTES,
        ),
        cost_estimate=pl.CostEstimate(
            flops=2 * S * B * D,                     # pe mul + elementwise add
            transcendentals=2 * S * D * grid[1],     # sin + cos per (s, d) tile
            bytes_accessed=2 * x.size * itemsize + 2 * D * 4,
        ),
    )(inv_freq, odd, x)


def _reference(x):
    """Pure-JAX reference mirroring the PyTorch module exactly."""
    S, B, D = x.shape
    position = jnp.arange(0, S, dtype=jnp.float32)[:, None]               # (S, 1)
    div_term = jnp.exp(jnp.arange(0, D, 2, dtype=jnp.float32)
                       * (-math.log(10000.0) / D))                        # (D/2,)
    pe = jnp.zeros((S, D), jnp.float32)
    pe = pe.at[:, 0::2].set(jnp.sin(position * div_term))
    pe = pe.at[:, 1::2].set(jnp.cos(position * div_term))
    return x + pe[:, None, :].astype(x.dtype)                             # (S,1,D)


if __name__ == "__main__":
    key = jax.random.PRNGKey(0)

    # Small shape consistent with the module: (seq_len, batch, d_model).
    seq_len, batch, d_model = 8, 2, 32
    x = jax.random.normal(key, (seq_len, batch, d_model), dtype=jnp.float32)
    out = jax.block_until_ready(positional_encoding(x))
    ref = _reference(x)
    assert out.shape == x.shape and out.dtype == x.dtype
    assert jnp.allclose(out, ref, atol=1e-5, rtol=1e-5), "mismatch vs reference"

    # Longer sequence: exercises multi-tile grid and large-position accuracy.
    key2 = jax.random.PRNGKey(1)
    x2 = jax.random.normal(key2, (512, 2, 64), dtype=jnp.float32)
    out2 = jax.block_until_ready(positional_encoding(x2))
    ref2 = _reference(x2)
    assert jnp.allclose(out2, ref2, atol=1e-5, rtol=1e-5), "mismatch at long seq"

    print("KERNEL_OK")
</pallas_src>

<mosaic_0001>
module attributes {stable_mosaic.version = 11 : i64} {
  func.func @_pos_enc_kernel(%arg0: i32, %arg1: i32, %arg2: memref<1x1x32xf32, #tpu.memory_space<vmem>>, %arg3: memref<1x1x32xf32, #tpu.memory_space<vmem>>, %arg4: memref<4x2x32xf32, #tpu.memory_space<vmem>>, %arg5: memref<4x2x32xf32, #tpu.memory_space<vmem>>) attributes {dimension_semantics = [#tpu.dimension_semantics<parallel>, #tpu.dimension_semantics<parallel>], iteration_bounds = array<i64: 2, 1>, scalar_prefetch = 0 : i64, scratch_operands = 0 : i64, tpu.core_type = #tpu.core_type<tc>, window_params = [{pipeline_mode = #tpu.pipeline_mode<synchronous>, transform_indices = @transform_0, window_bounds = array<i64: 1, 1, 32>}, {pipeline_mode = #tpu.pipeline_mode<synchronous>, transform_indices = @transform_1, window_bounds = array<i64: 1, 1, 32>}, {transform_indices = @transform_2, window_bounds = array<i64: 4, 2, 32>}, {transform_indices = @transform_3, window_bounds = array<i64: 4, 2, 32>}]} {
    %c4_i32 = arith.constant 4 : i32
    %0 = arith.muli %arg0, %c4_i32 : i32
    %1 = tpu.iota {dimensions = array<i32: 0>} : vector<4x1x1xi32>
    %2 = vector.broadcast %0 : i32 to vector<4x1x1xi32>
    %3 = arith.addi %2, %1 : vector<4x1x1xi32>
    %4 = arith.sitofp %3 : vector<4x1x1xi32> to vector<4x1x1xf32>
    %c0 = arith.constant 0 : index
    %c0_0 = arith.constant 0 : index
    %c0_1 = arith.constant 0 : index
    %5 = vector.load %arg2[%c0, %c0_0, %c0_1] : memref<1x1x32xf32, #tpu.memory_space<vmem>>, vector<1x1x32xf32>
    %6 = vector.broadcast %4 : vector<4x1x1xf32> to vector<4x1x32xf32>
    %7 = vector.broadcast %5 : vector<1x1x32xf32> to vector<4x1x32xf32>
    %8 = arith.mulf %6, %7 : vector<4x1x32xf32>
    %c0_2 = arith.constant 0 : index
    %c0_3 = arith.constant 0 : index
    %c0_4 = arith.constant 0 : index
    %9 = vector.load %arg3[%c0_2, %c0_3, %c0_4] : memref<1x1x32xf32, #tpu.memory_space<vmem>>, vector<1x1x32xf32>
    %cst = arith.constant 5.000000e-01 : f32
    %10 = vector.broadcast %cst : f32 to vector<1x1x32xf32>
    %11 = arith.cmpf ogt, %9, %10 : vector<1x1x32xf32>
    %12 = math.cos %8 : vector<4x1x32xf32>
    %13 = math.sin %8 : vector<4x1x32xf32>
    %14 = vector.shape_cast %11 : vector<1x1x32xi1> to vector<1x1x32xi1>
    %15 = vector.broadcast %14 : vector<1x1x32xi1> to vector<4x1x32xi1>
    %16 = arith.select %15, %12, %13 : vector<4x1x32xi1>, vector<4x1x32xf32>
    %c0_5 = arith.constant 0 : index
    %c0_6 = arith.constant 0 : index
    %c0_7 = arith.constant 0 : index
    %17 = vector.load %arg4[%c0_5, %c0_6, %c0_7] : memref<4x2x32xf32, #tpu.memory_space<vmem>>, vector<4x2x32xf32>
    %18 = vector.broadcast %16 : vector<4x1x32xf32> to vector<4x2x32xf32>
    %19 = arith.addf %17, %18 : vector<4x2x32xf32>
    %c0_8 = arith.constant 0 : index
    %c0_9 = arith.constant 0 : index
    %c0_10 = arith.constant 0 : index
    %20 = vector.load %arg5[%c0_8, %c0_9, %c0_10] : memref<4x2x32xf32, #tpu.memory_space<vmem>>, vector<4x2x32xf32>
    tpu.vector_store %arg5[%c0_8, %c0_9, %c0_10], %19 {strides = array<i32>} : memref<4x2x32xf32, #tpu.memory_space<vmem>>, vector<4x2x32xf32>,
    return
  }
  func.func @transform_0(%arg0: i32, %arg1: i32) -> (i32, i32, i32) {
    %c0_i32 = arith.constant 0 : i32
    %c0_i32_0 = arith.constant 0 : i32
    %c0_i32_1 = arith.constant 0 : i32
    %c0_i32_2 = arith.constant 0 : i32
    return %c0_i32, %c0_i32_0, %c0_i32_1 : i32, i32, i32
  }
  func.func @transform_1(%arg0: i32, %arg1: i32) -> (i32, i32, i32) {
    %c0_i32 = arith.constant 0 : i32
    %c0_i32_0 = arith.constant 0 : i32
    %c0_i32_1 = arith.constant 0 : i32
    %c0_i32_2 = arith.constant 0 : i32
    return %c0_i32, %c0_i32_0, %c0_i32_1 : i32, i32, i32
  }
  func.func @transform_2(%arg0: i32, %arg1: i32) -> (i32, i32, i32) {
    %c0_i32 = arith.constant 0 : i32
    %c0_i32_0 = arith.constant 0 : i32
    return %arg0, %arg1, %c0_i32 : i32, i32, i32
  }
  func.func @transform_3(%arg0: i32, %arg1: i32) -> (i32, i32, i32) {
    %c0_i32 = arith.constant 0 : i32
    %c0_i32_0 = arith.constant 0 : i32
    return %arg0, %arg1, %c0_i32 : i32, i32, i32
  }
}

</mosaic_0001>

<llo_original>
// kernel: tpu_custom_call.1
$region0: #{tpu_custom_call.1}
  #allocation0 [shape = 'u32[]', space=smem, size = 0x4, offset = 0x4, fixed_abs, tag = 'smem constant byte address 0x4 - core index']
  #allocation1 [shape = 'u32[72,128]{1,0:T(1,128)}', space=vmem, size = 0x9000, scoped, tag = 'internal scratch']
  %s0 = inlined_call_operand.hbm [shape: f32[1,1,32], index: 0, kind: input, shape index: {}]
  %s1 = inlined_call_operand.hbm [shape: f32[1,1,32], index: 1, kind: input, shape index: {}]
  %s2 = inlined_call_operand.hbm [shape: f32[8,2,32], index: 2, kind: input, shape index: {}]
  %s3 = inlined_call_operand.hbm [shape: f32[8,2,32], index: 3, kind: output, shape index: {}]
  %s4 = sld [smem:[#allocation0]]
  $region57: #{tpu_custom_call.1} parent=0
    _
  %s6 = ssub.s32 1, %s4
  %s7 = scalar_select 0, %s6, %s4
  $region1: #{tpu_custom_call.1} parent=0
    #allocation2 [shape = 'u8[512]{0}', space=vmem, size = 0x400, scoped, tag = 'input window, operand 0, single buffered']
    #allocation3 [shape = 's32[2]{0}', space=sflag, size = 0x8, scoped, tag = 'scoped memory for tpu_custom_call.1']
    #allocation4 [shape = 's32[2]{0}', space=sflag, size = 0x8, scoped, tag = 'scoped memory for tpu_custom_call.1']
    #allocation5 [shape = 'u8[512]{0}', space=vmem, size = 0x400, scoped, tag = 'input window, operand 1, single buffered']
    #allocation6 [shape = 's32[1]{0}', space=sflag, size = 0x4, scoped, tag = 'scoped memory for tpu_custom_call.1']
    #allocation7 [shape = 'u8[8192]{0}', space=vmem, size = 0x2000, scoped, tag = 'input window, operand 2']
    #allocation8 [shape = 'u8[8192]{0}', space=vmem, size = 0x2000, scoped, tag = 'output window, operand 0']
    %8 = vsyncpa [#allocation3], 0
    %9 = vsyncpa [#allocation6], 0
    %10 = vsyncpa [#allocation4], 0
    %s11 = scalar_lea.sflag [#allocation4], 1
    %12 = vsyncpa %s11, 0
    loop: start=0, step=1, limit=4
    $region2: #{tpu_custom_call.1} parent=1 // loop_pre_header
      _
    $region3: #{tpu_custom_call.1} parent=1 // loop_header
      %s14 = sphi 0, %s18
      %p15 = scmp.ge.s32.totalorder %s14, 4
      %s21 = sphi 0, %s33
      %s22 = sphi 0, %s29
      %s23 = sphi 0, %s21
      %s24 = sphi 0, %s22
      %s25 = sphi 0, %s23
      %s26 = sphi 0, %s24
      %s34 = sphi 0, %s34
      %s36 = sphi 0, %s34
      %s37 = sphi 0, %s36
      %s51 = sphi 0, %s37
      %s55 = sphi 0, %s55
      %s57 = sphi 0, %s55
      %s58 = sphi 0, %s57
      %s72 = sphi 0, %s58
      %s80 = sphi 0, %s82
      %s83 = sphi 0, %s80
      %s84 = sphi 0, %s83
      %s100 = sphi 0, %s84
      %s108 = sphi 0, %s110
      %s111 = sphi 0, %s108
      %s112 = sphi 0, %s111
      %s128 = sphi 0, %s112
    $region4: #{tpu_custom_call.1} parent=1 // loop_header_branch
      %17 = sbr.rel (%p15) target = $region8
    $region5: #{tpu_custom_call.1} parent=1 // loop_body
      %s19 = ssub.s32 %s14, 1
      %s20 = ssub.s32 %s14, 2
      %s27 = sadd.s32 1, %s22
      %p28 = scmp.ge.s32.totalorder %s27, 1
      %s29 = scalar_select %p28, 0, %s27
      %s30 = sadd.s32 1, %s21
      %s31 = scalar_select %p28, %s30, %s21
      %p32 = scmp.ge.s32.totalorder %s31, 2
      %s33 = scalar_select %p32, 0, %s31
      %s35 = sadd.s32 %s34, 1
      %p38 = scmp.eq.s32.totalorder %s14, 1
      %p39 = scmp.ne.s32.totalorder %s34, %s36
      %p40 = scmp.eq.s32.totalorder %s14, 0
      %p41 = por %p39, %p40
      %p42 = scmp.ne.s32.totalorder %s34, %s36
      %p43 = scmp.eq.s32.totalorder %s19, 1
      %p44 = por %p42, %p43
      %p45 = scmp.ne.s32.totalorder %s36, %s37
      %p46 = scmp.eq.s32.totalorder %s19, 0
      %p47 = por %p45, %p46
      %p48 = scmp.ne.s32.totalorder %s36, %s37
      %p49 = scmp.eq.s32.totalorder %s20, 1
      %p50 = por %p48, %p49
      %p52 = scmp.ne.s32.totalorder %s37, %s51
      %p53 = scmp.eq.s32.totalorder %s20, 0
      %p54 = por %p52, %p53
      %s56 = sadd.s32 %s55, 1
      %p59 = scmp.eq.s32.totalorder %s14, 1
      %p60 = scmp.ne.s32.totalorder %s55, %s57
      %p61 = scmp.eq.s32.totalorder %s14, 0
      %p62 = por %p60, %p61
      %p63 = scmp.ne.s32.totalorder %s55, %s57
      %p64 = scmp.eq.s32.totalorder %s19, 1
      %p65 = por %p63, %p64
      %p66 = scmp.ne.s32.totalorder %s57, %s58
      %p67 = scmp.eq.s32.totalorder %s19, 0
      %p68 = por %p66, %p67
      %p69 = scmp.ne.s32.totalorder %s57, %s58
      %p70 = scmp.eq.s32.totalorder %s20, 1
      %p71 = por %p69, %p70
      %p73 = scmp.ne.s32.totalorder %s58, %s72
      %p74 = scmp.eq.s32.totalorder %s20, 0
      %p75 = por %p73, %p74
      %s76 = ssub.s32 %s21, %s33
      %s77 = ssub.s32 %s22, %s29
      %s78 = sor.u32 %s76, %s77
      %p79 = scmp.eq.s32.totalorder %s78, 0
      %s81 = sadd.s32 %s80, 1
      %s82 = scalar_select %p79, %s80, %s81
      %p85 = pneg %p79
      %p86 = scmp.eq.s32.totalorder %s14, 1
      %p87 = por %p85, %p86
      %p88 = scmp.ne.s32.totalorder %s80, %s83
      %p89 = scmp.eq.s32.totalorder %s14, 0
      %p90 = por %p88, %p89
      %p91 = scmp.ne.s32.totalorder %s80, %s83
      %p92 = scmp.eq.s32.totalorder %s19, 1
      %p93 = por %p91, %p92
      %p94 = scmp.ne.s32.totalorder %s83, %s84
      %p95 = scmp.eq.s32.totalorder %s19, 0
      %p96 = por %p94, %p95
      %p97 = scmp.ne.s32.totalorder %s83, %s84
      %p98 = scmp.eq.s32.totalorder %s20, 1
      %p99 = por %p97, %p98
      %p101 = scmp.ne.s32.totalorder %s84, %s100
      %p102 = scmp.eq.s32.totalorder %s20, 0
      %p103 = por %p101, %p102
      %s104 = ssub.s32 %s21, %s33
      %s105 = ssub.s32 %s22, %s29
      %s106 = sor.u32 %s104, %s105
      %p107 = scmp.eq.s32.totalorder %s106, 0
      %s109 = sadd.s32 %s108, 1
      %s110 = scalar_select %p107, %s108, %s109
      %p113 = pneg %p107
      %p114 = scmp.eq.s32.totalorder %s14, 1
      %p115 = por %p113, %p114
      %p116 = scmp.ne.s32.totalorder %s108, %s111
      %p117 = scmp.eq.s32.totalorder %s14, 0
      %p118 = por %p116, %p117
      %p119 = scmp.ne.s32.totalorder %s108, %s111
      %p120 = scmp.eq.s32.totalorder %s19, 1
      %p121 = por %p119, %p120
      %p122 = scmp.ne.s32.totalorder %s111, %s112
      %p123 = scmp.eq.s32.totalorder %s19, 0
      %p124 = por %p122, %p123
      %p125 = scmp.ne.s32.totalorder %s111, %s112
      %p126 = scmp.eq.s32.totalorder %s20, 1
      %p127 = por %p125, %p126
      %p129 = scmp.ne.s32.totalorder %s112, %s128
      %p130 = scmp.eq.s32.totalorder %s20, 0
      %p131 = por %p129, %p130
      %p132 = scmp.le.s32.totalorder 1, %s14
      %p133 = scmp.lt.s32.totalorder %s14, 3
      %p134 = pnand %p132, %p133
      %p135 = pneg %p134
      // Predicated region
      $region9: #{tpu_custom_call.1} parent=5 // pred_check
        _
      $region10: #{tpu_custom_call.1} parent=5 // pred_check_branch
        %137 = sbr.rel (%p134) target = $region12
      $region11: #{tpu_custom_call.1} parent=5 // pred_region
        %s138 = ssub.s32 %s14, 1
        // Predicated region
        $region13: #{tpu_custom_call.1} parent=11 // pred_check
          %p139 = pneg %p47
        $region14: #{tpu_custom_call.1} parent=11 // pred_check_branch
          %141 = sbr.rel (%p139) target = $region16
        $region15: #{tpu_custom_call.1} parent=11 // pred_region
          %143 = vsyncadd [#allocation3], 0
          %s145 = sshll.u32 %s0, 4
          %s146 = int_to_ptr.hbm [resolvable:$true] %s145
          %s147 = sshll.u32 [#allocation2], 4
          %s148 = int_to_ptr.vmem [resolvable:$true] %s147
          %150 = dma.hbm_to_vmem [thread:$0]  %s146, 16, %s148, [#allocation3]
        $region16: #{tpu_custom_call.1} parent=11 // pred_fallthru
          _
        // Predicated region
        $region17: #{tpu_custom_call.1} parent=11 // pred_check
          %p151 = pneg %p68
        $region18: #{tpu_custom_call.1} parent=11 // pred_check_branch
          %153 = sbr.rel (%p151) target = $region20
        $region19: #{tpu_custom_call.1} parent=11 // pred_region
          %155 = vsyncadd [#allocation6], 0
          %s157 = sshll.u32 %s1, 4
          %s158 = int_to_ptr.hbm [resolvable:$true] %s157
          %s159 = sshll.u32 [#allocation5], 4
          %s160 = int_to_ptr.vmem [resolvable:$true] %s159
          %162 = dma.hbm_to_vmem [thread:$0]  %s158, 16, %s160, [#allocation6]
        $region20: #{tpu_custom_call.1} parent=11 // pred_fallthru
          _
      $region12: #{tpu_custom_call.1} parent=5 // pred_fallthru
        _
      %p163 = scmp.lt.s32.totalorder %s14, 2
      // Predicated region
      $region21: #{tpu_custom_call.1} parent=5 // pred_check
        %p164 = pneg %p163
      $region22: #{tpu_custom_call.1} parent=5 // pred_check_branch
        %166 = sbr.rel (%p164) target = $region24
      $region23: #{tpu_custom_call.1} parent=5 // pred_region
        // Predicated region
        $region25: #{tpu_custom_call.1} parent=23 // pred_check
          %p167 = pneg %p90
        $region26: #{tpu_custom_call.1} parent=23 // pred_check_branch
          %169 = sbr.rel (%p167) target = $region28
        $region27: #{tpu_custom_call.1} parent=23 // pred_region
          %s170 = sand.u32 %s14, 1
          %s171 = scalar_lea.sflag [#allocation3], %s170
          %s172 = sand.u32 %s80, 1
          %s173 = smul.addr %s172, 8
          %s174 = scalar_lea.vmem [#allocation7], %s173
          %s175 = smul.u32 4, %s21
          %177 = vsyncadd %s171, 0
          %s178 = sadd.s32 %s22, %s175
          %s179 = smul.addr %s178, 2
          %s180 = scalar_lea.hbm %s2, %s179
          %s181 = sshll.u32 %s180, 4
          %s182 = int_to_ptr.hbm [resolvable:$true] %s181
          %s183 = sshll.u32 %s174, 4
          %s184 = int_to_ptr.vmem [resolvable:$true] %s183
          %189 = dma.hbm_to_vmem [thread:$0]  %s182, 128, %s184, %s171, 32, 32, 2
        $region28: #{tpu_custom_call.1} parent=23 // pred_fallthru
          _
      $region24: #{tpu_custom_call.1} parent=5 // pred_fallthru
        _
      %p190 = scmp.le.s32.totalorder 1, %s14
      %p191 = scmp.lt.s32.totalorder %s14, 3
      %p192 = pnand %p190, %p191
      %p193 = pneg %p192
      // Predicated region
      $region29: #{tpu_custom_call.1} parent=5 // pred_check
        _
      $region30: #{tpu_custom_call.1} parent=5 // pred_check_branch
        %195 = sbr.rel (%p192) target = $region32
      $region31: #{tpu_custom_call.1} parent=5 // pred_region
        %s196 = ssub.s32 %s14, 1
        // Predicated region
        $region33: #{tpu_custom_call.1} parent=31 // pred_check
          %p197 = pneg %p47
        $region34: #{tpu_custom_call.1} parent=31 // pred_check_branch
          %199 = sbr.rel (%p197) target = $region36
        $region35: #{tpu_custom_call.1} parent=31 // pred_region
          %201 = dma.done [#allocation3], 16
        $region36: #{tpu_custom_call.1} parent=31 // pred_fallthru
          _
        // Predicated region
        $region37: #{tpu_custom_call.1} parent=31 // pred_check
          %p202 = pneg %p68
        $region38: #{tpu_custom_call.1} parent=31 // pred_check_branch
          %204 = sbr.rel (%p202) target = $region40
        $region39: #{tpu_custom_call.1} parent=31 // pred_region
          %206 = dma.done [#allocation6], 16
        $region40: #{tpu_custom_call.1} parent=31 // pred_fallthru
          _
        %s207 = sand.u32 %s19, 1
        %s208 = scalar_lea.sflag [#allocation3], %s207
        %s209 = sand.u32 %s83, 1
        %s210 = smul.addr %s209, 8
        %s211 = scalar_lea.vmem [#allocation7], %s210
        // Predicated region
        $region41: #{tpu_custom_call.1} parent=31 // pred_check
          %p212 = pneg %p96
        $region42: #{tpu_custom_call.1} parent=31 // pred_check_branch
          %214 = sbr.rel (%p212) target = $region44
        $region43: #{tpu_custom_call.1} parent=31 // pred_region
          %216 = dma.done %s208, 128
        $region44: #{tpu_custom_call.1} parent=31 // pred_fallthru
          _
        %p217 = pneg %p47
        %p218 = pneg %p44
        %p219 = pneg %p68
        %p220 = pneg %p65
        %s221 = sand.u32 %s19, 1
        %s222 = scalar_lea.sflag [#allocation3], %s221
        %s223 = sand.u32 %s83, 1
        %s224 = smul.addr %s223, 8
        %s225 = scalar_lea.vmem [#allocation7], %s224
        %p226 = pneg %p96
        %p227 = pneg %p93
        %p228 = pneg %p124
        %p229 = pneg %p121
        %s230 = sand.u32 %s111, 1
        %s231 = scalar_lea.sflag [#allocation4], %s230
        %s232 = sand.u32 %s111, 1
        %s233 = smul.addr %s232, 8
        %s234 = scalar_lea.vmem [#allocation8], %s233
        %s235 = smul.u32 4, %s23
        %s236 = smul.u32 4, %s23
        %s237 = smul.u32 %s23, 4
        %v238 = vstv %s237
        %v239 = vadd.s32 %v238, 1
        %v240 = vadd.s32 %v238, 2
        %v241 = vadd.s32 %v238, 3
        %v242 = vcvt.s32.f32 %v238
        %v243 = vcvt.s32.f32 %v239
        %v244 = vcvt.s32.f32 %v240
        %v245 = vcvt.s32.f32 %v241
        %v246 = vld [vmem:[#allocation2] sm:$0x1]
        %v247 = vmul.f32 %v242, %v246
        %v248 = vmul.f32 %v243, %v246
        %v249 = vmul.f32 %v244, %v246
        %v250 = vmul.f32 %v245, %v246
        %v251 = vld [vmem:[#allocation5] sm:$0x1]
        %vm252 = vcmp.gt.f32.partialorder %v251, 0.5
        %v253 = vand.u32 2147483647, %v247
        %vm254 = vcmp.le.f32.partialorder %v253, 0.7853982
        %vm255 = vcmp.lt.s32.totalorder %v247, 0
        %v256 = vand.u32 %v247, 2139095040
        %v257 = vshrl.u32 %v256, 23
        %v258 = vsub.s32 %v257, 127
        %v259 = vand.u32 2147483647, %v247
        %v260 = vand.u32 %v259, 8388607
        %v261 = vor.u32 %v260, 8388608
        %v262 = vsub.s32 0, %v261
        %v263 = vadd.s32 %v258, 1
        %vm264 = vcmp.gt.s32.totalorder %v263, 0
        %v265 = vsel %vm264, %v263, 0
        %v266 = vshrl.u32 %v265, 5
        %v267 = vand.u32 %v265, 31
        %v268 = vsub.s32 32, %v267
        %v269 = vshrl.u32 683565275, %v268
        %v270 = vshll.u32 683565275, %v267
        %v271 = vshrl.u32 2475754826, %v268
        %v272 = vor.u32 %v270, %v271
        %v273 = vshll.u32 2475754826, %v267
        %v274 = vshrl.u32 2131351028, %v268
        %v275 = vor.u32 %v273, %v274
        %v276 = vshll.u32 2131351028, %v267
        %v277 = vshrl.u32 2102212464, %v268
        %v278 = vor.u32 %v276, %v277
        %v279 = vshll.u32 2102212464, %v267
        %v280 = vshrl.u32 920167782, %v268
        %v281 = vor.u32 %v279, %v280
        %v282 = vshll.u32 920167782, %v267
        %v283 = vshrl.u32 1326507024, %v268
        %v284 = vor.u32 %v282, %v283
        %vm285 = vcmp.lt.s32.totalorder %v266, 1
        %vm286 = vcmp.lt.s32.totalorder %v266, 2
        %vm287 = vcmp.lt.s32.totalorder %v266, 3
        %vm288 = vcmp.lt.s32.totalorder %v266, 4
        %v289 = vsel %vm285, %v269, %v272
        %v290 = vsel %vm288, %v278, 2102212464
        %v291 = vsel %vm287, %v275, %v290
        %v292 = vsel %vm286, %v289, %v291
        %v293 = vsel %vm285, %v272, %v275
        %v294 = vsel %vm288, %v281, 920167782
        %v295 = vsel %vm287, %v278, %v294
        %v296 = vsel %vm286, %v293, %v295
        %v297 = vsel %vm285, %v275, %v278
        %v298 = vsel %vm288, %v284, 1326507024
        %v299 = vsel %vm287, %v281, %v298
        %v300 = vsel %vm286, %v297, %v299
        %v301 = vshll.u32 %v261, 8
        %v302 = vand.u32 %v301, 65535
        %v303 = vshrl.u32 %v301, 16
        %v304 = vand.u32 %v300, 65535
        %v305 = vshrl.u32 %v300, 16
        %v306 = vmul.u32 %v302, %v304
        %v307 = vmul.u32 %v302, %v305
        %v308 = vmul.u32 %v303, %v304
        %v309 = vmul.u32 %v303, %v305
        %v310 = vshll.u32 %v307, 16
        %v311 = vshrl.u32 %v307, 16
        %v312 = vshll.u32 %v308, 16
        %v313 = vshrl.u32 %v308, 16
        %vm314 = vc.u32 %v306, %v310
        %v315 = vsel %vm314, 1, 0
        %v316 = vadd.s32 %v306, %v310
        %v317 = vadd.s32 %v309, %v315
        %vm318 = vc.u32 %v316, %v312
        %v319 = vsel %vm318, 1, 0
        %v320 = vadd.s32 %v316, %v312
        %v321 = vadd.s32 %v317, %v319
        %v322 = vadd.s32 %v321, %v311
        %v323 = vadd.s32 %v322, %v313
        %v324 = vand.u32 %v301, 65535
        %v325 = vshrl.u32 %v301, 16
        %v326 = vand.u32 %v296, 65535
        %v327 = vshrl.u32 %v296, 16
        %v328 = vmul.u32 %v324, %v326
        %v329 = vmul.u32 %v324, %v327
        %v330 = vmul.u32 %v325, %v326
        %v331 = vmul.u32 %v325, %v327
        %v332 = vshll.u32 %v329, 16
        %v333 = vshrl.u32 %v329, 16
        %v334 = vshll.u32 %v330, 16
        %v335 = vshrl.u32 %v330, 16
        %vm336 = vc.u32 %v328, %v332
        %v337 = vsel %vm336, 1, 0
        %v338 = vadd.s32 %v328, %v332
        %v339 = vadd.s32 %v331, %v337
        %vm340 = vc.u32 %v338, %v334
        %v341 = vsel %vm340, 1, 0
        %v342 = vadd.s32 %v338, %v334
        %v343 = vadd.s32 %v339, %v341
        %v344 = vadd.s32 %v343, %v333
        %v345 = vadd.s32 %v344, %v335
        %v346 = vmul.u32 %v301, %v292
        %v347 = vadd.s32 %v323, %v342
        %vm348 = vc.u32 %v323, %v342
        %v349 = vadd.s32 %v345, 1
        %v350 = vsel %vm348, %v349, %v345
        %v351 = vadd.s32 %v346, %v350
        %v352 = vadd.s32 %v351, 536870912
        %v353 = vshrl.u32 %v352, 30
        %v354 = vshll.u32 %v353, 30
        %v355 = vsub.s32 %v351, %v354
        %vm356 = vcmp.lt.s32.totalorder %v355, 0
        %v357 = vsub.s32 0, %v355
        %v358 = vsel %vm356, %v357, %v355
        %v359 = vclz %v358
        %v360 = vsub.s32 %v359, 2
        %vm361 = vcmp.gt.s32.totalorder 0, %v360
        %v362 = vsel %vm361, 0, %v360
        %v363 = vsub.s32 32, %v362
        %v364 = vshll.u32 %v355, %v362
        %v365 = vshrl.u32 %v347, %v363
        %v366 = vor.u32 %v364, %v365
        %v367 = vsub.s32 4294967266, %v362
        %v368 = vadd.s32 %v367, 127
        %v369 = vshll.u32 %v368, 23
        %v370 = vor.u32 4788187, %v369
        %v371 = vand.u32 2147483647, %v370
        %v373 = vcvt.s32.f32 %v366
        %v374 = vmul.f32 %v373, %v371
        %v375 = vxor.u32 %v374, 2147483648
        %v376 = vsel %vm255, %v375, %v374
        %v377 = vsub.s32 4, %v353
        %v378 = vsel %vm255, %v377, %v353
        %v379 = vsel %vm254, %v247, %v376
        %v380 = vsel %vm254, 0, %v378
        %v381 = vmul.f32 %v379, %v379
        %v382 = vmul.f32 %v381, -0.001358992
        %v383 = vadd.f32 %v382, 0.041655596
        %v384 = vmul.f32 %v381, %v383
        %v385 = vadd.f32 %v384, -0.4999988
        %v386 = vmul.f32 %v381, %v385
        %v387 = vadd.f32 1.0, %v386
        %v388 = vmul.f32 %v379, %v379
        %v389 = vmul.f32 %v388, -0.00019511016
        %v390 = vadd.f32 %v389, 0.008332121
        %v391 = vmul.f32 %v388, %v390
        %v392 = vadd.f32 %v391, -0.16666654
        %v393 = vmul.f32 %v388, %v392
        %v394 = vadd.f32 %v393, 1.0
        %v395 = vmul.f32 %v394, %v379
        %vm396 = vweird.f32 %v247
        %v397 = vand.u32 %v380, 3
        %vm398 = vcmp.lt.s32.totalorder %v397, 2
        %vm399 = vcmp.eq.s32.totalorder %v397, 0
        %v400 = vxor.u32 %v395, 2147483648
        %v401 = vsel %vm399, %v387, %v400
        %vm402 = vcmp.eq.s32.totalorder %v397, 2
        %v403 = vxor.u32 %v387, 2147483648
        %v404 = vsel %vm402, %v403, %v395
        %v405 = vsel %vm398, %v401, %v404
        %v406 = vsel %vm396, nan, %v405
        %v407 = vand.u32 2147483647, %v248
        %vm408 = vcmp.le.f32.partialorder %v407, 0.7853982
        %vm409 = vcmp.lt.s32.totalorder %v248, 0
        %v410 = vand.u32 %v248, 2139095040
        %v411 = vshrl.u32 %v410, 23
        %v412 = vsub.s32 %v411, 127
        %v413 = vand.u32 2147483647, %v248
        %v414 = vand.u32 %v413, 8388607
        %v415 = vor.u32 %v414, 8388608
        %v416 = vsub.s32 0, %v415
        %v417 = vadd.s32 %v412, 1
        %vm418 = vcmp.gt.s32.totalorder %v417, 0
        %v419 = vsel %vm418, %v417, 0
        %v420 = vshrl.u32 %v419, 5
        %v421 = vand.u32 %v419, 31
        %v422 = vsub.s32 32, %v421
        %v423 = vshrl.u32 683565275, %v422
        %v424 = vshll.u32 683565275, %v421
        %v425 = vshrl.u32 2475754826, %v422
        %v426 = vor.u32 %v424, %v425
        %v427 = vshll.u32 2475754826, %v421
        %v428 = vshrl.u32 2131351028, %v422
        %v429 = vor.u32 %v427, %v428
        %v430 = vshll.u32 2131351028, %v421
        %v431 = vshrl.u32 2102212464, %v422
        %v432 = vor.u32 %v430, %v431
        %v433 = vshll.u32 2102212464, %v421
        %v434 = vshrl.u32 920167782, %v422
        %v435 = vor.u32 %v433, %v434
        %v436 = vshll.u32 920167782, %v421
        %v437 = vshrl.u32 1326507024, %v422
        %v438 = vor.u32 %v436, %v437
        %vm439 = vcmp.lt.s32.totalorder %v420, 1
        %vm440 = vcmp.lt.s32.totalorder %v420, 2
        %vm441 = vcmp.lt.s32.totalorder %v420, 3
        %vm442 = vcmp.lt.s32.totalorder %v420, 4
        %v443 = vsel %vm439, %v423, %v426
        %v444 = vsel %vm442, %v432, 2102212464
        %v445 = vsel %vm441, %v429, %v444
        %v446 = vsel %vm440, %v443, %v445
        %v447 = vsel %vm439, %v426, %v429
        %v448 = vsel %vm442, %v435, 920167782
        %v449 = vsel %vm441, %v432, %v448
        %v450 = vsel %vm440, %v447, %v449
        %v451 = vsel %vm439, %v429, %v432
        %v452 = vsel %vm442, %v438, 1326507024
        %v453 = vsel %vm441, %v435, %v452
        %v454 = vsel %vm440, %v451, %v453
        %v455 = vshll.u32 %v415, 8
        %v456 = vand.u32 %v455, 65535
        %v457 = vshrl.u32 %v455, 16
        %v458 = vand.u32 %v454, 65535
        %v459 = vshrl.u32 %v454, 16
        %v460 = vmul.u32 %v456, %v458
        %v461 = vmul.u32 %v456, %v459
        %v462 = vmul.u32 %v457, %v458
        %v463 = vmul.u32 %v457, %v459
        %v464 = vshll.u32 %v461, 16
        %v465 = vshrl.u32 %v461, 16
        %v466 = vshll.u32 %v462, 16
        %v467 = vshrl.u32 %v462, 16
        %vm468 = vc.u32 %v460, %v464
        %v469 = vsel %vm468, 1, 0
        %v470 = vadd.s32 %v460, %v464
        %v471 = vadd.s32 %v463, %v469
        %vm472 = vc.u32 %v470, %v466
        %v473 = vsel %vm472, 1, 0
        %v474 = vadd.s32 %v470, %v466
        %v475 = vadd.s32 %v471, %v473
        %v476 = vadd.s32 %v475, %v465
        %v477 = vadd.s32 %v476, %v467
        %v478 = vand.u32 %v455, 65535
        %v479 = vshrl.u32 %v455, 16
        %v480 = vand.u32 %v450, 65535
        %v481 = vshrl.u32 %v450, 16
        %v482 = vmul.u32 %v478, %v480
        %v483 = vmul.u32 %v478, %v481
        %v484 = vmul.u32 %v479, %v480
        %v485 = vmul.u32 %v479, %v481
        %v486 = vshll.u32 %v483, 16
        %v487 = vshrl.u32 %v483, 16
        %v488 = vshll.u32 %v484, 16
        %v489 = vshrl.u32 %v484, 16
        %vm490 = vc.u32 %v482, %v486
        %v491 = vsel %vm490, 1, 0
        %v492 = vadd.s32 %v482, %v486
        %v493 = vadd.s32 %v485, %v491
        %vm494 = vc.u32 %v492, %v488
        %v495 = vsel %vm494, 1, 0
        %v496 = vadd.s32 %v492, %v488
        %v497 = vadd.s32 %v493, %v495
        %v498 = vadd.s32 %v497, %v487
        %v499 = vadd.s32 %v498, %v489
        %v500 = vmul.u32 %v455, %v446
        %v501 = vadd.s32 %v477, %v496
        %vm502 = vc.u32 %v477, %v496
        %v503 = vadd.s32 %v499, 1
        %v504 = vsel %vm502, %v503, %v499
        %v505 = vadd.s32 %v500, %v504
        %v506 = vadd.s32 %v505, 536870912
        %v507 = vshrl.u32 %v506, 30
        %v508 = vshll.u32 %v507, 30
        %v509 = vsub.s32 %v505, %v508
        %vm510 = vcmp.lt.s32.totalorder %v509, 0
        %v511 = vsub.s32 0, %v509
        %v512 = vsel %vm510, %v511, %v509
        %v513 = vclz %v512
        %v514 = vsub.s32 %v513, 2
        %vm515 = vcmp.gt.s32.totalorder 0, %v514
        %v516 = vsel %vm515, 0, %v514
        %v517 = vsub.s32 32, %v516
        %v518 = vshll.u32 %v509, %v516
        %v519 = vshrl.u32 %v501, %v517
        %v520 = vor.u32 %v518, %v519
        %v521 = vsub.s32 4294967266, %v516
        %v522 = vadd.s32 %v521, 127
        %v523 = vshll.u32 %v522, 23
        %v524 = vor.u32 4788187, %v523
        %v525 = vand.u32 2147483647, %v524
        %v527 = vcvt.s32.f32 %v520
        %v528 = vmul.f32 %v527, %v525
        %v529 = vxor.u32 %v528, 2147483648
        %v530 = vsel %vm409, %v529, %v528
        %v531 = vsub.s32 4, %v507
        %v532 = vsel %vm409, %v531, %v507
        %v533 = vsel %vm408, %v248, %v530
        %v534 = vsel %vm408, 0, %v532
        %v535 = vmul.f32 %v533, %v533
        %v536 = vmul.f32 %v535, -0.001358992
        %v537 = vadd.f32 %v536, 0.041655596
        %v538 = vmul.f32 %v535, %v537
        %v539 = vadd.f32 %v538, -0.4999988
        %v540 = vmul.f32 %v535, %v539
        %v541 = vadd.f32 1.0, %v540
        %v542 = vmul.f32 %v533, %v533
        %v543 = vmul.f32 %v542, -0.00019511016
        %v544 = vadd.f32 %v543, 0.008332121
        %v545 = vmul.f32 %v542, %v544
        %v546 = vadd.f32 %v545, -0.16666654
        %v547 = vmul.f32 %v542, %v546
        %v548 = vadd.f32 %v547, 1.0
        %v549 = vmul.f32 %v548, %v533
        %vm550 = vweird.f32 %v248
        %v551 = vand.u32 %v534, 3
        %vm552 = vcmp.lt.s32.totalorder %v551, 2
        %vm553 = vcmp.eq.s32.totalorder %v551, 0
        %v554 = vxor.u32 %v549, 2147483648
        %v555 = vsel %vm553, %v541, %v554
        %vm556 = vcmp.eq.s32.totalorder %v551, 2
        %v557 = vxor.u32 %v541, 2147483648
        %v558 = vsel %vm556, %v557, %v549
        %v559 = vsel %vm552, %v555, %v558
        %v560 = vsel %vm550, nan, %v559
        %v561 = vand.u32 2147483647, %v249
        %vm562 = vcmp.le.f32.partialorder %v561, 0.7853982
        %vm563 = vcmp.lt.s32.totalorder %v249, 0
        %v564 = vand.u32 %v249, 2139095040
        %v565 = vshrl.u32 %v564, 23
        %v566 = vsub.s32 %v565, 127
        %v567 = vand.u32 2147483647, %v249
        %v568 = vand.u32 %v567, 8388607
        %v569 = vor.u32 %v568, 8388608
        %v570 = vsub.s32 0, %v569
        %v571 = vadd.s32 %v566, 1
        %vm572 = vcmp.gt.s32.totalorder %v571, 0
        %v573 = vsel %vm572, %v571, 0
        %v574 = vshrl.u32 %v573, 5
        %v575 = vand.u32 %v573, 31
        %v576 = vsub.s32 32, %v575
        %v577 = vshrl.u32 683565275, %v576
        %v578 = vshll.u32 683565275, %v575
        %v579 = vshrl.u32 2475754826, %v576
        %v580 = vor.u32 %v578, %v579
        %v581 = vshll.u32 2475754826, %v575
        %v582 = vshrl.u32 2131351028, %v576
        %v583 = vor.u32 %v581, %v582
        %v584 = vshll.u32 2131351028, %v575
        %v585 = vshrl.u32 2102212464, %v576
        %v586 = vor.u32 %v584, %v585
        %v587 = vshll.u32 2102212464, %v575
        %v588 = vshrl.u32 920167782, %v576
        %v589 = vor.u32 %v587, %v588
        %v590 = vshll.u32 920167782, %v575
        %v591 = vshrl.u32 1326507024, %v576
        %v592 = vor.u32 %v590, %v591
        %vm593 = vcmp.lt.s32.totalorder %v574, 1
        %vm594 = vcmp.lt.s32.totalorder %v574, 2
        %vm595 = vcmp.lt.s32.totalorder %v574, 3
        %vm596 = vcmp.lt.s32.totalorder %v574, 4
        %v597 = vsel %vm593, %v577, %v580
        %v598 = vsel %vm596, %v586, 2102212464
        %v599 = vsel %vm595, %v583, %v598
        %v600 = vsel %vm594, %v597, %v599
        %v601 = vsel %vm593, %v580, %v583
        %v602 = vsel %vm596, %v589, 920167782
        %v603 = vsel %vm595, %v586, %v602
        %v604 = vsel %vm594, %v601, %v603
        %v605 = vsel %vm593, %v583, %v586
        %v606 = vsel %vm596, %v592, 1326507024
        %v607 = vsel %vm595, %v589, %v606
        %v608 = vsel %vm594, %v605, %v607
        %v609 = vshll.u32 %v569, 8
        %v610 = vand.u32 %v609, 65535
        %v611 = vshrl.u32 %v609, 16
        %v612 = vand.u32 %v608, 65535
        %v613 = vshrl.u32 %v608, 16
        %v614 = vmul.u32 %v610, %v612
        %v615 = vmul.u32 %v610, %v613
        %v616 = vmul.u32 %v611, %v612
        %v617 = vmul.u32 %v611, %v613
        %v618 = vshll.u32 %v615, 16
        %v619 = vshrl.u32 %v615, 16
        %v620 = vshll.u32 %v616, 16
        %v621 = vshrl.u32 %v616, 16
        %vm622 = vc.u32 %v614, %v618
        %v623 = vsel %vm622, 1, 0
        %v624 = vadd.s32 %v614, %v618
        %v625 = vadd.s32 %v617, %v623
        %vm626 = vc.u32 %v624, %v620
        %v627 = vsel %vm626, 1, 0
        %v628 = vadd.s32 %v624, %v620
        %v629 = vadd.s32 %v625, %v627
        %v630 = vadd.s32 %v629, %v619
        %v631 = vadd.s32 %v630, %v621
        %v632 = vand.u32 %v609, 65535
        %v633 = vshrl.u32 %v609, 16
        %v634 = vand.u32 %v604, 65535
        %v635 = vshrl.u32 %v604, 16
        %v636 = vmul.u32 %v632, %v634
        %v637 = vmul.u32 %v632, %v635
        %v638 = vmul.u32 %v633, %v634
        %v639 = vmul.u32 %v633, %v635
        %v640 = vshll.u32 %v637, 16
        %v641 = vshrl.u32 %v637, 16
        %v642 = vshll.u32 %v638, 16
        %v643 = vshrl.u32 %v638, 16
        %vm644 = vc.u32 %v636, %v640
        %v645 = vsel %vm644, 1, 0
        %v646 = vadd.s32 %v636, %v640
        %v647 = vadd.s32 %v639, %v645
        %vm648 = vc.u32 %v646, %v642
        %v649 = vsel %vm648, 1, 0
        %v650 = vadd.s32 %v646, %v642
        %v651 = vadd.s32 %v647, %v649
        %v652 = vadd.s32 %v651, %v641
        %v653 = vadd.s32 %v652, %v643
        %v654 = vmul.u32 %v609, %v600
        %v655 = vadd.s32 %v631, %v650
        %vm656 = vc.u32 %v631, %v650
        %v657 = vadd.s32 %v653, 1
        %v658 = vsel %vm656, %v657, %v653
        %v659 = vadd.s32 %v654, %v658
        %v660 = vadd.s32 %v659, 536870912
        %v661 = vshrl.u32 %v660, 30
        %v662 = vshll.u32 %v661, 30
        %v663 = vsub.s32 %v659, %v662
        %vm664 = vcmp.lt.s32.totalorder %v663, 0
        %v665 = vsub.s32 0, %v663
        %v666 = vsel %vm664, %v665, %v663
        %v667 = vclz %v666
        %v668 = vsub.s32 %v667, 2
        %vm669 = vcmp.gt.s32.totalorder 0, %v668
        %v670 = vsel %vm669, 0, %v668
        %v671 = vsub.s32 32, %v670
        %v672 = vshll.u32 %v663, %v670
        %v673 = vshrl.u32 %v655, %v671
        %v674 = vor.u32 %v672, %v673
        %v675 = vsub.s32 4294967266, %v670
        %v676 = vadd.s32 %v675, 127
        %v677 = vshll.u32 %v676, 23
        %v678 = vor.u32 4788187, %v677
        %v679 = vand.u32 2147483647, %v678
        %v681 = vcvt.s32.f32 %v674
        %v682 = vmul.f32 %v681, %v679
        %v683 = vxor.u32 %v682, 2147483648
        %v684 = vsel %vm563, %v683, %v682
        %v685 = vsub.s32 4, %v661
        %v686 = vsel %vm563, %v685, %v661
        %v687 = vsel %vm562, %v249, %v684
        %v688 = vsel %vm562, 0, %v686
        %v689 = vmul.f32 %v687, %v687
        %v690 = vmul.f32 %v689, -0.001358992
        %v691 = vadd.f32 %v690, 0.041655596
        %v692 = vmul.f32 %v689, %v691
        %v693 = vadd.f32 %v692, -0.4999988
        %v694 = vmul.f32 %v689, %v693
        %v695 = vadd.f32 1.0, %v694
        %v696 = vmul.f32 %v687, %v687
        %v697 = vmul.f32 %v696, -0.00019511016
        %v698 = vadd.f32 %v697, 0.008332121
        %v699 = vmul.f32 %v696, %v698
        %v700 = vadd.f32 %v699, -0.16666654
        %v701 = vmul.f32 %v696, %v700
        %v702 = vadd.f32 %v701, 1.0
        %v703 = vmul.f32 %v702, %v687
        %vm704 = vweird.f32 %v249
        %v705 = vand.u32 %v688, 3
        %vm706 = vcmp.lt.s32.totalorder %v705, 2
        %vm707 = vcmp.eq.s32.totalorder %v705, 0
        %v708 = vxor.u32 %v703, 2147483648
        %v709 = vsel %vm707, %v695, %v708
        %vm710 = vcmp.eq.s32.totalorder %v705, 2
        %v711 = vxor.u32 %v695, 2147483648
        %v712 = vsel %vm710, %v711, %v703
        %v713 = vsel %vm706, %v709, %v712
        %v714 = vsel %vm704, nan, %v713
        %v715 = vand.u32 2147483647, %v250
        %vm716 = vcmp.le.f32.partialorder %v715, 0.7853982
        %vm717 = vcmp.lt.s32.totalorder %v250, 0
        %v718 = vand.u32 %v250, 2139095040
        %v719 = vshrl.u32 %v718, 23
        %v720 = vsub.s32 %v719, 127
        %v721 = vand.u32 2147483647, %v250
        %v722 = vand.u32 %v721, 8388607
        %v723 = vor.u32 %v722, 8388608
        %v724 = vsub.s32 0, %v723
        %v725 = vadd.s32 %v720, 1
        %vm726 = vcmp.gt.s32.totalorder %v725, 0
        %v727 = vsel %vm726, %v725, 0
        %v728 = vshrl.u32 %v727, 5
        %v729 = vand.u32 %v727, 31
        %v730 = vsub.s32 32, %v729
        %v731 = vshrl.u32 683565275, %v730
        %v732 = vshll.u32 683565275, %v729
        %v733 = vshrl.u32 2475754826, %v730
        %v734 = vor.u32 %v732, %v733
        %v735 = vshll.u32 2475754826, %v729
        %v736 = vshrl.u32 2131351028, %v730
        %v737 = vor.u32 %v735, %v736
        %v738 = vshll.u32 2131351028, %v729
        %v739 = vshrl.u32 2102212464, %v730
        %v740 = vor.u32 %v738, %v739
        %v741 = vshll.u32 2102212464, %v729
        %v742 = vshrl.u32 920167782, %v730
        %v743 = vor.u32 %v741, %v742
        %v744 = vshll.u32 920167782, %v729
        %v745 = vshrl.u32 1326507024, %v730
        %v746 = vor.u32 %v744, %v745
        %vm747 = vcmp.lt.s32.totalorder %v728, 1
        %vm748 = vcmp.lt.s32.totalorder %v728, 2
        %vm749 = vcmp.lt.s32.totalorder %v728, 3
        %vm750 = vcmp.lt.s32.totalorder %v728, 4
        %v751 = vsel %vm747, %v731, %v734
        %v752 = vsel %vm750, %v740, 2102212464
        %v753 = vsel %vm749, %v737, %v752
        %v754 = vsel %vm748, %v751, %v753
        %v755 = vsel %vm747, %v734, %v737
        %v756 = vsel %vm750, %v743, 920167782
        %v757 = vsel %vm749, %v740, %v756
        %v758 = vsel %vm748, %v755, %v757
        %v759 = vsel %vm747, %v737, %v740
        %v760 = vsel %vm750, %v746, 1326507024
        %v761 = vsel %vm749, %v743, %v760
        %v762 = vsel %vm748, %v759, %v761
        %v763 = vshll.u32 %v723, 8
        %v764 = vand.u32 %v763, 65535
        %v765 = vshrl.u32 %v763, 16
        %v766 = vand.u32 %v762, 65535
        %v767 = vshrl.u32 %v762, 16
        %v768 = vmul.u32 %v764, %v766
        %v769 = vmul.u32 %v764, %v767
        %v770 = vmul.u32 %v765, %v766
        %v771 = vmul.u32 %v765, %v767
        %v772 = vshll.u32 %v769, 16
        %v773 = vshrl.u32 %v769, 16
        %v774 = vshll.u32 %v770, 16
        %v775 = vshrl.u32 %v770, 16
        %vm776 = vc.u32 %v768, %v772
        %v777 = vsel %vm776, 1, 0
        %v778 = vadd.s32 %v768, %v772
        %v779 = vadd.s32 %v771, %v777
        %vm780 = vc.u32 %v778, %v774
        %v781 = vsel %vm780, 1, 0
        %v782 = vadd.s32 %v778, %v774
        %v783 = vadd.s32 %v779, %v781
        %v784 = vadd.s32 %v783, %v773
        %v785 = vadd.s32 %v784, %v775
        %v786 = vand.u32 %v763, 65535
        %v787 = vshrl.u32 %v763, 16
        %v788 = vand.u32 %v758, 65535
        %v789 = vshrl.u32 %v758, 16
        %v790 = vmul.u32 %v786, %v788
        %v791 = vmul.u32 %v786, %v789
        %v792 = vmul.u32 %v787, %v788
        %v793 = vmul.u32 %v787, %v789
        %v794 = vshll.u32 %v791, 16
        %v795 = vshrl.u32 %v791, 16
        %v796 = vshll.u32 %v792, 16
        %v797 = vshrl.u32 %v792, 16
        %vm798 = vc.u32 %v790, %v794
        %v799 = vsel %vm798, 1, 0
        %v800 = vadd.s32 %v790, %v794
        %v801 = vadd.s32 %v793, %v799
        %vm802 = vc.u32 %v800, %v796
        %v803 = vsel %vm802, 1, 0
        %v804 = vadd.s32 %v800, %v796
        %v805 = vadd.s32 %v801, %v803
        %v806 = vadd.s32 %v805, %v795
        %v807 = vadd.s32 %v806, %v797
        %v808 = vmul.u32 %v763, %v754
        %v809 = vadd.s32 %v785, %v804
        %vm810 = vc.u32 %v785, %v804
        %v811 = vadd.s32 %v807, 1
        %v812 = vsel %vm810, %v811, %v807
        %v813 = vadd.s32 %v808, %v812
        %v814 = vadd.s32 %v813, 536870912
        %v815 = vshrl.u32 %v814, 30
        %v816 = vshll.u32 %v815, 30
        %v817 = vsub.s32 %v813, %v816
        %vm818 = vcmp.lt.s32.totalorder %v817, 0
        %v819 = vsub.s32 0, %v817
        %v820 = vsel %vm818, %v819, %v817
        %v821 = vclz %v820
        %v822 = vsub.s32 %v821, 2
        %vm823 = vcmp.gt.s32.totalorder 0, %v822
        %v824 = vsel %vm823, 0, %v822
        %v825 = vsub.s32 32, %v824
        %v826 = vshll.u32 %v817, %v824
        %v827 = vshrl.u32 %v809, %v825
        %v828 = vor.u32 %v826, %v827
        %v829 = vsub.s32 4294967266, %v824
        %v830 = vadd.s32 %v829, 127
        %v831 = vshll.u32 %v830, 23
        %v832 = vor.u32 4788187, %v831
        %v833 = vand.u32 2147483647, %v832
        %v835 = vcvt.s32.f32 %v828
        %v836 = vmul.f32 %v835, %v833
        %v837 = vxor.u32 %v836, 2147483648
        %v838 = vsel %vm717, %v837, %v836
        %v839 = vsub.s32 4, %v815
        %v840 = vsel %vm717, %v839, %v815
        %v841 = vsel %vm716, %v250, %v838
        %v842 = vsel %vm716, 0, %v840
        %v843 = vmul.f32 %v841, %v841
        %v844 = vmul.f32 %v843, -0.001358992
        %v845 = vadd.f32 %v844, 0.041655596
        %v846 = vmul.f32 %v843, %v845
        %v847 = vadd.f32 %v846, -0.4999988
        %v848 = vmul.f32 %v843, %v847
        %v849 = vadd.f32 1.0, %v848
        %v850 = vmul.f32 %v841, %v841
        %v851 = vmul.f32 %v850, -0.00019511016
        %v852 = vadd.f32 %v851, 0.008332121
        %v853 = vmul.f32 %v850, %v852
        %v854 = vadd.f32 %v853, -0.16666654
        %v855 = vmul.f32 %v850, %v854
        %v856 = vadd.f32 %v855, 1.0
        %v857 = vmul.f32 %v856, %v841
        %vm858 = vweird.f32 %v250
        %v859 = vand.u32 %v842, 3
        %vm860 = vcmp.lt.s32.totalorder %v859, 2
        %vm861 = vcmp.eq.s32.totalorder %v859, 0
        %v862 = vxor.u32 %v857, 2147483648
        %v863 = vsel %vm861, %v849, %v862
        %vm864 = vcmp.eq.s32.totalorder %v859, 2
        %v865 = vxor.u32 %v849, 2147483648
        %v866 = vsel %vm864, %v865, %v857
        %v867 = vsel %vm860, %v863, %v866
        %v868 = vsel %vm858, nan, %v867
        %v869 = vand.u32 2147483647, %v247
        %vm870 = vcmp.le.f32.partialorder %v869, 0.7853982
        %vm871 = vcmp.lt.s32.totalorder %v247, 0
        %v872 = vand.u32 %v247, 2139095040
        %v873 = vshrl.u32 %v872, 23
        %v874 = vsub.s32 %v873, 127
        %v875 = vand.u32 2147483647, %v247
        %v876 = vand.u32 %v875, 8388607
        %v877 = vor.u32 %v876, 8388608
        %v878 = vsub.s32 0, %v877
        %v879 = vadd.s32 %v874, 1
        %vm880 = vcmp.gt.s32.totalorder %v879, 0
        %v881 = vsel %vm880, %v879, 0
        %v882 = vshrl.u32 %v881, 5
        %v883 = vand.u32 %v881, 31
        %v884 = vsub.s32 32, %v883
        %v885 = vshrl.u32 683565275, %v884
        %v886 = vshll.u32 683565275, %v883
        %v887 = vshrl.u32 2475754826, %v884
        %v888 = vor.u32 %v886, %v887
        %v889 = vshll.u32 2475754826, %v883
        %v890 = vshrl.u32 2131351028, %v884
        %v891 = vor.u32 %v889, %v890
        %v892 = vshll.u32 2131351028, %v883
        %v893 = vshrl.u32 2102212464, %v884
        %v894 = vor.u32 %v892, %v893
        %v895 = vshll.u32 2102212464, %v883
        %v896 = vshrl.u32 920167782, %v884
        %v897 = vor.u32 %v895, %v896
        %v898 = vshll.u32 920167782, %v883
        %v899 = vshrl.u32 1326507024, %v884
        %v900 = vor.u32 %v898, %v899
        %vm901 = vcmp.lt.s32.totalorder %v882, 1
        %vm902 = vcmp.lt.s32.totalorder %v882, 2
        %vm903 = vcmp.lt.s32.totalorder %v882, 3
        %vm904 = vcmp.lt.s32.totalorder %v882, 4
        %v905 = vsel %vm901, %v885, %v888
        %v906 = vsel %vm904, %v894, 2102212464
        %v907 = vsel %vm903, %v891, %v906
        %v908 = vsel %vm902, %v905, %v907
        %v909 = vsel %vm901, %v888, %v891
        %v910 = vsel %vm904, %v897, 920167782
        %v911 = vsel %vm903, %v894, %v910
        %v912 = vsel %vm902, %v909, %v911
        %v913 = vsel %vm901, %v891, %v894
        %v914 = vsel %vm904, %v900, 1326507024
        %v915 = vsel %vm903, %v897, %v914
        %v916 = vsel %vm902, %v913, %v915
        %v917 = vshll.u32 %v877, 8
        %v918 = vand.u32 %v917, 65535
        %v919 = vshrl.u32 %v917, 16
        %v920 = vand.u32 %v916, 65535
        %v921 = vshrl.u32 %v916, 16
        %v922 = vmul.u32 %v918, %v920
        %v923 = vmul.u32 %v918, %v921
        %v924 = vmul.u32 %v919, %v920
        %v925 = vmul.u32 %v919, %v921
        %v926 = vshll.u32 %v923, 16
        %v927 = vshrl.u32 %v923, 16
        %v928 = vshll.u32 %v924, 16
        %v929 = vshrl.u32 %v924, 16
        %vm930 = vc.u32 %v922, %v926
        %v931 = vsel %vm930, 1, 0
        %v932 = vadd.s32 %v922, %v926
        %v933 = vadd.s32 %v925, %v931
        %vm934 = vc.u32 %v932, %v928
        %v935 = vsel %vm934, 1, 0
        %v936 = vadd.s32 %v932, %v928
        %v937 = vadd.s32 %v933, %v935
        %v938 = vadd.s32 %v937, %v927
        %v939 = vadd.s32 %v938, %v929
        %v940 = vand.u32 %v917, 65535
        %v941 = vshrl.u32 %v917, 16
        %v942 = vand.u32 %v912, 65535
        %v943 = vshrl.u32 %v912, 16
        %v944 = vmul.u32 %v940, %v942
        %v945 = vmul.u32 %v940, %v943
        %v946 = vmul.u32 %v941, %v942
        %v947 = vmul.u32 %v941, %v943
        %v948 = vshll.u32 %v945, 16
        %v949 = vshrl.u32 %v945, 16
        %v950 = vshll.u32 %v946, 16
        %v951 = vshrl.u32 %v946, 16
        %vm952 = vc.u32 %v944, %v948
        %v953 = vsel %vm952, 1, 0
        %v954 = vadd.s32 %v944, %v948
        %v955 = vadd.s32 %v947, %v953
        %vm956 = vc.u32 %v954, %v950
        %v957 = vsel %vm956, 1, 0
        %v958 = vadd.s32 %v954, %v950
        %v959 = vadd.s32 %v955, %v957
        %v960 = vadd.s32 %v959, %v949
        %v961 = vadd.s32 %v960, %v951
        %v962 = vmul.u32 %v917, %v908
        %v963 = vadd.s32 %v939, %v958
        %vm964 = vc.u32 %v939, %v958
        %v965 = vadd.s32 %v961, 1
        %v966 = vsel %vm964, %v965, %v961
        %v967 = vadd.s32 %v962, %v966
        %v968 = vadd.s32 %v967, 536870912
        %v969 = vshrl.u32 %v968, 30
        %v970 = vshll.u32 %v969, 30
        %v971 = vsub.s32 %v967, %v970
        %vm972 = vcmp.lt.s32.totalorder %v971, 0
        %v973 = vsub.s32 0, %v971
        %v974 = vsel %vm972, %v973, %v971
        %v975 = vclz %v974
        %v976 = vsub.s32 %v975, 2
        %vm977 = vcmp.gt.s32.totalorder 0, %v976
        %v978 = vsel %vm977, 0, %v976
        %v979 = vsub.s32 32, %v978
        %v980 = vshll.u32 %v971, %v978
        %v981 = vshrl.u32 %v963, %v979
        %v982 = vor.u32 %v980, %v981
        %v983 = vsub.s32 4294967266, %v978
        %v984 = vadd.s32 %v983, 127
        %v985 = vshll.u32 %v984, 23
        %v986 = vor.u32 4788187, %v985
        %v987 = vand.u32 2147483647, %v986
        %v989 = vcvt.s32.f32 %v982
        %v990 = vmul.f32 %v989, %v987
        %v991 = vxor.u32 %v990, 2147483648
        %v992 = vsel %vm871, %v991, %v990
        %v993 = vsub.s32 4, %v969
        %v994 = vsel %vm871, %v993, %v969
        %v995 = vsel %vm870, %v247, %v992
        %v996 = vsel %vm870, 0, %v994
        %v997 = vmul.f32 %v995, %v995
        %v998 = vmul.f32 %v997, -0.001358992
        %v999 = vadd.f32 %v998, 0.041655596
        %v1000 = vmul.f32 %v997, %v999
        %v1001 = vadd.f32 %v1000, -0.4999988
        %v1002 = vmul.f32 %v997, %v1001
        %v1003 = vadd.f32 1.0, %v1002
        %v1004 = vmul.f32 %v995, %v995
        %v1005 = vmul.f32 %v1004, -0.00019511016
        %v1006 = vadd.f32 %v1005, 0.008332121
        %v1007 = vmul.f32 %v1004, %v1006
        %v1008 = vadd.f32 %v1007, -0.16666654
        %v1009 = vmul.f32 %v1004, %v1008
        %v1010 = vadd.f32 %v1009, 1.0
        %v1011 = vmul.f32 %v1010, %v995
        %vm1012 = vweird.f32 %v247
        %v1013 = vadd.s32 %v996, 3
        %v1014 = vand.u32 %v1013, 3
        %vm1015 = vcmp.lt.s32.totalorder %v1014, 2
        %vm1016 = vcmp.eq.s32.totalorder %v1014, 0
        %v1017 = vxor.u32 %v1011, 2147483648
        %v1018 = vsel %vm1016, %v1003, %v1017
        %vm1019 = vcmp.eq.s32.totalorder %v1014, 2
        %v1020 = vxor.u32 %v1003, 2147483648
        %v1021 = vsel %vm1019, %v1020, %v1011
        %v1022 = vsel %vm1015, %v1018, %v1021
        %v1023 = vsel %vm1012, nan, %v1022
        %v1024 = vand.u32 2147483647, %v248
        %vm1025 = vcmp.le.f32.partialorder %v1024, 0.7853982
        %vm1026 = vcmp.lt.s32.totalorder %v248, 0
        %v1027 = vand.u32 %v248, 2139095040
        %v1028 = vshrl.u32 %v1027, 23
        %v1029 = vsub.s32 %v1028, 127
        %v1030 = vand.u32 2147483647, %v248
        %v1031 = vand.u32 %v1030, 8388607
        %v1032 = vor.u32 %v1031, 8388608
        %v1033 = vsub.s32 0, %v1032
        %v1034 = vadd.s32 %v1029, 1
        %vm1035 = vcmp.gt.s32.totalorder %v1034, 0
        %v1036 = vsel %vm1035, %v1034, 0
        %v1037 = vshrl.u32 %v1036, 5
        %v1038 = vand.u32 %v1036, 31
        %v1039 = vsub.s32 32, %v1038
        %v1040 = vshrl.u32 683565275, %v1039
        %v1041 = vshll.u32 683565275, %v1038
        %v1042 = vshrl.u32 2475754826, %v1039
        %v1043 = vor.u32 %v1041, %v1042
        %v1044 = vshll.u32 2475754826, %v1038
        %v1045 = vshrl.u32 2131351028, %v1039
        %v1046 = vor.u32 %v1044, %v1045
        %v1047 = vshll.u32 2131351028, %v1038
        %v1048 = vshrl.u32 2102212464, %v1039
        %v1049 = vor.u32 %v1047, %v1048
        %v1050 = vshll.u32 2102212464, %v1038
        %v1051 = vshrl.u32 920167782, %v1039
        %v1052 = vor.u32 %v1050, %v1051
        %v1053 = vshll.u32 920167782, %v1038
        %v1054 = vshrl.u32 1326507024, %v1039
        %v1055 = vor.u32 %v1053, %v1054
        %vm1056 = vcmp.lt.s32.totalorder %v1037, 1
        %vm1057 = vcmp.lt.s32.totalorder %v1037, 2
        %vm1058 = vcmp.lt.s32.totalorder %v1037, 3
        %vm1059 = vcmp.lt.s32.totalorder %v1037, 4
        %v1060 = vsel %vm1056, %v1040, %v1043
        %v1061 = vsel %vm1059, %v1049, 2102212464
        %v1062 = vsel %vm1058, %v1046, %v1061
        %v1063 = vsel %vm1057, %v1060, %v1062
        %v1064 = vsel %vm1056, %v1043, %v1046
        %v1065 = vsel %vm1059, %v1052, 920167782
        %v1066 = vsel %vm1058, %v1049, %v1065
        %v1067 = vsel %vm1057, %v1064, %v1066
        %v1068 = vsel %vm1056, %v1046, %v1049
        %v1069 = vsel %vm1059, %v1055, 1326507024
        %v1070 = vsel %vm1058, %v1052, %v1069
        %v1071 = vsel %vm1057, %v1068, %v1070
        %v1072 = vshll.u32 %v1032, 8
        %v1073 = vand.u32 %v1072, 65535
        %v1074 = vshrl.u32 %v1072, 16
        %v1075 = vand.u32 %v1071, 65535
        %v1076 = vshrl.u32 %v1071, 16
        %v1077 = vmul.u32 %v1073, %v1075
        %v1078 = vmul.u32 %v1073, %v1076
        %v1079 = vmul.u32 %v1074, %v1075
        %v1080 = vmul.u32 %v1074, %v1076
        %v1081 = vshll.u32 %v1078, 16
        %v1082 = vshrl.u32 %v1078, 16
        %v1083 = vshll.u32 %v1079, 16
        %v1084 = vshrl.u32 %v1079, 16
        %vm1085 = vc.u32 %v1077, %v1081
        %v1086 = vsel %vm1085, 1, 0
        %v1087 = vadd.s32 %v1077, %v1081
        %v1088 = vadd.s32 %v1080, %v1086
        %vm1089 = vc.u32 %v1087, %v1083
        %v1090 = vsel %vm1089, 1, 0
        %v1091 = vadd.s32 %v1087, %v1083
        %v1092 = vadd.s32 %v1088, %v1090
        %v1093 = vadd.s32 %v1092, %v1082
        %v1094 = vadd.s32 %v1093, %v1084
        %v1095 = vand.u32 %v1072, 65535
        %v1096 = vshrl.u32 %v1072, 16
        %v1097 = vand.u32 %v1067, 65535
        %v1098 = vshrl.u32 %v1067, 16
        %v1099 = vmul.u32 %v1095, %v1097
        %v1100 = vmul.u32 %v1095, %v1098
        %v1101 = vmul.u32 %v1096, %v1097
        %v1102 = vmul.u32 %v1096, %v1098
        %v1103 = vshll.u32 %v1100, 16
        %v1104 = vshrl.u32 %v1100, 16
        %v1105 = vshll.u32 %v1101, 16
        %v1106 = vshrl.u32 %v1101, 16
        %vm1107 = vc.u32 %v1099, %v1103
        %v1108 = vsel %vm1107, 1, 0
        %v1109 = vadd.s32 %v1099, %v1103
        %v1110 = vadd.s32 %v1102, %v1108
        %vm1111 = vc.u32 %v1109, %v1105
        %v1112 = vsel %vm1111, 1, 0
        %v1113 = vadd.s32 %v1109, %v1105
        %v1114 = vadd.s32 %v1110, %v1112
        %v1115 = vadd.s32 %v1114, %v1104
        %v1116 = vadd.s32 %v1115, %v1106
        %v1117 = vmul.u32 %v1072, %v1063
        %v1118 = vadd.s32 %v1094, %v1113
        %vm1119 = vc.u32 %v1094, %v1113
        %v1120 = vadd.s32 %v1116, 1
        %v1121 = vsel %vm1119, %v1120, %v1116
        %v1122 = vadd.s32 %v1117, %v1121
        %v1123 = vadd.s32 %v1122, 536870912
        %v1124 = vshrl.u32 %v1123, 30
        %v1125 = vshll.u32 %v1124, 30
        %v1126 = vsub.s32 %v1122, %v1125
        %vm1127 = vcmp.lt.s32.totalorder %v1126, 0
        %v1128 = vsub.s32 0, %v1126
        %v1129 = vsel %vm1127, %v1128, %v1126
        %v1130 = vclz %v1129
        %v1131 = vsub.s32 %v1130, 2
        %vm1132 = vcmp.gt.s32.totalorder 0, %v1131
        %v1133 = vsel %vm1132, 0, %v1131
        %v1134 = vsub.s32 32, %v1133
        %v1135 = vshll.u32 %v1126, %v1133
        %v1136 = vshrl.u32 %v1118, %v1134
        %v1137 = vor.u32 %v1135, %v1136
        %v1138 = vsub.s32 4294967266, %v1133
        %v1139 = vadd.s32 %v1138, 127
        %v1140 = vshll.u32 %v1139, 23
        %v1141 = vor.u32 4788187, %v1140
        %v1142 = vand.u32 2147483647, %v1141
        %v1144 = vcvt.s32.f32 %v1137
        %v1145 = vmul.f32 %v1144, %v1142
        %v1146 = vxor.u32 %v1145, 2147483648
        %v1147 = vsel %vm1026, %v1146, %v1145
        %v1148 = vsub.s32 4, %v1124
        %v1149 = vsel %vm1026, %v1148, %v1124
        %v1150 = vsel %vm1025, %v248, %v1147
        %v1151 = vsel %vm1025, 0, %v1149
        %v1152 = vmul.f32 %v1150, %v1150
        %v1153 = vmul.f32 %v1152, -0.001358992
        %v1154 = vadd.f32 %v1153, 0.041655596
        %v1155 = vmul.f32 %v1152, %v1154
        %v1156 = vadd.f32 %v1155, -0.4999988
        %v1157 = vmul.f32 %v1152, %v1156
        %v1158 = vadd.f32 1.0, %v1157
        %v1159 = vmul.f32 %v1150, %v1150
        %v1160 = vmul.f32 %v1159, -0.00019511016
        %v1161 = vadd.f32 %v1160, 0.008332121
        %v1162 = vmul.f32 %v1159, %v1161
        %v1163 = vadd.f32 %v1162, -0.16666654
        %v1164 = vmul.f32 %v1159, %v1163
        %v1165 = vadd.f32 %v1164, 1.0
        %v1166 = vmul.f32 %v1165, %v1150
        %vm1167 = vweird.f32 %v248
        %v1168 = vadd.s32 %v1151, 3
        %v1169 = vand.u32 %v1168, 3
        %vm1170 = vcmp.lt.s32.totalorder %v1169, 2
        %vm1171 = vcmp.eq.s32.totalorder %v1169, 0
        %v1172 = vxor.u32 %v1166, 2147483648
        %v1173 = vsel %vm1171, %v1158, %v1172
        %vm1174 = vcmp.eq.s32.totalorder %v1169, 2
        %v1175 = vxor.u32 %v1158, 2147483648
        %v1176 = vsel %vm1174, %v1175, %v1166
        %v1177 = vsel %vm1170, %v1173, %v1176
        %v1178 = vsel %vm1167, nan, %v1177
        %v1179 = vand.u32 2147483647, %v249
        %vm1180 = vcmp.le.f32.partialorder %v1179, 0.7853982
        %vm1181 = vcmp.lt.s32.totalorder %v249, 0
        %v1182 = vand.u32 %v249, 2139095040
        %v1183 = vshrl.u32 %v1182, 23
        %v1184 = vsub.s32 %v1183, 127
        %v1185 = vand.u32 2147483647, %v249
        %v1186 = vand.u32 %v1185, 8388607
        %v1187 = vor.u32 %v1186, 8388608
        %v1188 = vsub.s32 0, %v1187
        %v1189 = vadd.s32 %v1184, 1
        %vm1190 = vcmp.gt.s32.totalorder %v1189, 0
        %v1191 = vsel %vm1190, %v1189, 0
        %v1192 = vshrl.u32 %v1191, 5
        %v1193 = vand.u32 %v1191, 31
        %v1194 = vsub.s32 32, %v1193
        %v1195 = vshrl.u32 683565275, %v1194
        %v1196 = vshll.u32 683565275, %v1193
        %v1197 = vshrl.u32 2475754826, %v1194
        %v1198 = vor.u32 %v1196, %v1197
        %v1199 = vshll.u32 2475754826, %v1193
        %v1200 = vshrl.u32 2131351028, %v1194
        %v1201 = vor.u32 %v1199, %v1200
        %v1202 = vshll.u32 2131351028, %v1193
        %v1203 = vshrl.u32 2102212464, %v1194
        %v1204 = vor.u32 %v1202, %v1203
        %v1205 = vshll.u32 2102212464, %v1193
        %v1206 = vshrl.u32 920167782, %v1194
        %v1207 = vor.u32 %v1205, %v1206
        %v1208 = vshll.u32 920167782, %v1193
        %v1209 = vshrl.u32 1326507024, %v1194
        %v1210 = vor.u32 %v1208, %v1209
        %vm1211 = vcmp.lt.s32.totalorder %v1192, 1
        %vm1212 = vcmp.lt.s32.totalorder %v1192, 2
        %vm1213 = vcmp.lt.s32.totalorder %v1192, 3
        %vm1214 = vcmp.lt.s32.totalorder %v1192, 4
        %v1215 = vsel %vm1211, %v1195, %v1198
        %v1216 = vsel %vm1214, %v1204, 2102212464
        %v1217 = vsel %vm1213, %v1201, %v1216
        %v1218 = vsel %vm1212, %v1215, %v1217
        %v1219 = vsel %vm1211, %v1198, %v1201
        %v1220 = vsel %vm1214, %v1207, 920167782
        %v1221 = vsel %vm1213, %v1204, %v1220
        %v1222 = vsel %vm1212, %v1219, %v1221
        %v1223 = vsel %vm1211, %v1201, %v1204
        %v1224 = vsel %vm1214, %v1210, 1326507024
        %v1225 = vsel %vm1213, %v1207, %v1224
        %v1226 = vsel %vm1212, %v1223, %v1225
        %v1227 = vshll.u32 %v1187, 8
        %v1228 = vand.u32 %v1227, 65535
        %v1229 = vshrl.u32 %v1227, 16
        %v1230 = vand.u32 %v1226, 65535
        %v1231 = vshrl.u32 %v1226, 16
        %v1232 = vmul.u32 %v1228, %v1230
        %v1233 = vmul.u32 %v1228, %v1231
        %v1234 = vmul.u32 %v1229, %v1230
        %v1235 = vmul.u32 %v1229, %v1231
        %v1236 = vshll.u32 %v1233, 16
        %v1237 = vshrl.u32 %v1233, 16
        %v1238 = vshll.u32 %v1234, 16
        %v1239 = vshrl.u32 %v1234, 16
        %vm1240 = vc.u32 %v1232, %v1236
        %v1241 = vsel %vm1240, 1, 0
        %v1242 = vadd.s32 %v1232, %v1236
        %v1243 = vadd.s32 %v1235, %v1241
        %vm1244 = vc.u32 %v1242, %v1238
        %v1245 = vsel %vm1244, 1, 0
        %v1246 = vadd.s32 %v1242, %v1238
        %v1247 = vadd.s32 %v1243, %v1245
        %v1248 = vadd.s32 %v1247, %v1237
        %v1249 = vadd.s32 %v1248, %v1239
        %v1250 = vand.u32 %v1227, 65535
        %v1251 = vshrl.u32 %v1227, 16
        %v1252 = vand.u32 %v1222, 65535
        %v1253 = vshrl.u32 %v1222, 16
        %v1254 = vmul.u32 %v1250, %v1252
        %v1255 = vmul.u32 %v1250, %v1253
        %v1256 = vmul.u32 %v1251, %v1252
        %v1257 = vmul.u32 %v1251, %v1253
        %v1258 = vshll.u32 %v1255, 16
        %v1259 = vshrl.u32 %v1255, 16
        %v1260 = vshll.u32 %v1256, 16
        %v1261 = vshrl.u32 %v1256, 16
        %vm1262 = vc.u32 %v1254, %v1258
        %v1263 = vsel %vm1262, 1, 0
        %v1264 = vadd.s32 %v1254, %v1258
        %v1265 = vadd.s32 %v1257, %v1263
        %vm1266 = vc.u32 %v1264, %v1260
        %v1267 = vsel %vm1266, 1, 0
        %v1268 = vadd.s32 %v1264, %v1260
        %v1269 = vadd.s32 %v1265, %v1267
        %v1270 = vadd.s32 %v1269, %v1259
        %v1271 = vadd.s32 %v1270, %v1261
        %v1272 = vmul.u32 %v1227, %v1218
        %v1273 = vadd.s32 %v1249, %v1268
        %vm1274 = vc.u32 %v1249, %v1268
        %v1275 = vadd.s32 %v1271, 1
        %v1276 = vsel %vm1274, %v1275, %v1271
        %v1277 = vadd.s32 %v1272, %v1276
        %v1278 = vadd.s32 %v1277, 536870912
        %v1279 = vshrl.u32 %v1278, 30
        %v1280 = vshll.u32 %v1279, 30
        %v1281 = vsub.s32 %v1277, %v1280
        %vm1282 = vcmp.lt.s32.totalorder %v1281, 0
        %v1283 = vsub.s32 0, %v1281
        %v1284 = vsel %vm1282, %v1283, %v1281
        %v1285 = vclz %v1284
        %v1286 = vsub.s32 %v1285, 2
        %vm1287 = vcmp.gt.s32.totalorder 0, %v1286
        %v1288 = vsel %vm1287, 0, %v1286
        %v1289 = vsub.s32 32, %v1288
        %v1290 = vshll.u32 %v1281, %v1288
        %v1291 = vshrl.u32 %v1273, %v1289
        %v1292 = vor.u32 %v1290, %v1291
        %v1293 = vsub.s32 4294967266, %v1288
        %v1294 = vadd.s32 %v1293, 127
        %v1295 = vshll.u32 %v1294, 23
        %v1296 = vor.u32 4788187, %v1295
        %v1297 = vand.u32 2147483647, %v1296
        %v1299 = vcvt.s32.f32 %v1292
        %v1300 = vmul.f32 %v1299, %v1297
        %v1301 = vxor.u32 %v1300, 2147483648
        %v1302 = vsel %vm1181, %v1301, %v1300
        %v1303 = vsub.s32 4, %v1279
        %v1304 = vsel %vm1181, %v1303, %v1279
        %v1305 = vsel %vm1180, %v249, %v1302
        %v1306 = vsel %vm1180, 0, %v1304
        %v1307 = vmul.f32 %v1305, %v1305
        %v1308 = vmul.f32 %v1307, -0.001358992
        %v1309 = vadd.f32 %v1308, 0.041655596
        %v1310 = vmul.f32 %v1307, %v1309
        %v1311 = vadd.f32 %v1310, -0.4999988
        %v1312 = vmul.f32 %v1307, %v1311
        %v1313 = vadd.f32 1.0, %v1312
        %v1314 = vmul.f32 %v1305, %v1305
        %v1315 = vmul.f32 %v1314, -0.00019511016
        %v1316 = vadd.f32 %v1315, 0.008332121
        %v1317 = vmul.f32 %v1314, %v1316
        %v1318 = vadd.f32 %v1317, -0.16666654
        %v1319 = vmul.f32 %v1314, %v1318
        %v1320 = vadd.f32 %v1319, 1.0
        %v1321 = vmul.f32 %v1320, %v1305
        %vm1322 = vweird.f32 %v249
        %v1323 = vadd.s32 %v1306, 3
        %v1324 = vand.u32 %v1323, 3
        %vm1325 = vcmp.lt.s32.totalorder %v1324, 2
        %vm1326 = vcmp.eq.s32.totalorder %v1324, 0
        %v1327 = vxor.u32 %v1321, 2147483648
        %v1328 = vsel %vm1326, %v1313, %v1327
        %vm1329 = vcmp.eq.s32.totalorder %v1324, 2
        %v1330 = vxor.u32 %v1313, 2147483648
        %v1331 = vsel %vm1329, %v1330, %v1321
        %v1332 = vsel %vm1325, %v1328, %v1331
        %v1333 = vsel %vm1322, nan, %v1332
        %v1334 = vand.u32 2147483647, %v250
        %vm1335 = vcmp.le.f32.partialorder %v1334, 0.7853982
        %vm1336 = vcmp.lt.s32.totalorder %v250, 0
        %v1337 = vand.u32 %v250, 2139095040
        %v1338 = vshrl.u32 %v1337, 23
        %v1339 = vsub.s32 %v1338, 127
        %v1340 = vand.u32 2147483647, %v250
        %v1341 = vand.u32 %v1340, 8388607
        %v1342 = vor.u32 %v1341, 8388608
        %v1343 = vsub.s32 0, %v1342
        %v1344 = vadd.s32 %v1339, 1
        %vm1345 = vcmp.gt.s32.totalorder %v1344, 0
        %v1346 = vsel %vm1345, %v1344, 0
        %v1347 = vshrl.u32 %v1346, 5
        %v1348 = vand.u32 %v1346, 31
        %v1349 = vsub.s32 32, %v1348
        %v1350 = vshrl.u32 683565275, %v1349
        %v1351 = vshll.u32 683565275, %v1348
        %v1352 = vshrl.u32 2475754826, %v1349
        %v1353 = vor.u32 %v1351, %v1352
        %v1354 = vshll.u32 2475754826, %v1348
        %v1355 = vshrl.u32 2131351028, %v1349
        %v1356 = vor.u32 %v1354, %v1355
        %v1357 = vshll.u32 2131351028, %v1348
        %v1358 = vshrl.u32 2102212464, %v1349
        %v1359 = vor.u32 %v1357, %v1358
        %v1360 = vshll.u32 2102212464, %v1348
        %v1361 = vshrl.u32 920167782, %v1349
        %v1362 = vor.u32 %v1360, %v1361
        %v1363 = vshll.u32 920167782, %v1348
        %v1364 = vshrl.u32 1326507024, %v1349
        %v1365 = vor.u32 %v1363, %v1364
        %vm1366 = vcmp.lt.s32.totalorder %v1347, 1
        %vm1367 = vcmp.lt.s32.totalorder %v1347, 2
        %vm1368 = vcmp.lt.s32.totalorder %v1347, 3
        %vm1369 = vcmp.lt.s32.totalorder %v1347, 4
        %v1370 = vsel %vm1366, %v1350, %v1353
        %v1371 = vsel %vm1369, %v1359, 2102212464
        %v1372 = vsel %vm1368, %v1356, %v1371
        %v1373 = vsel %vm1367, %v1370, %v1372
        %v1374 = vsel %vm1366, %v1353, %v1356
        %v1375 = vsel %vm1369, %v1362, 920167782
        %v1376 = vsel %vm1368, %v1359, %v1375
        %v1377 = vsel %vm1367, %v1374, %v1376
        %v1378 = vsel %vm1366, %v1356, %v1359
        %v1379 = vsel %vm1369, %v1365, 1326507024
        %v1380 = vsel %vm1368, %v1362, %v1379
        %v1381 = vsel %vm1367, %v1378, %v1380
        %v1382 = vshll.u32 %v1342, 8
        %v1383 = vand.u32 %v1382, 65535
        %v1384 = vshrl.u32 %v1382, 16
        %v1385 = vand.u32 %v1381, 65535
        %v1386 = vshrl.u32 %v1381, 16
        %v1387 = vmul.u32 %v1383, %v1385
        %v1388 = vmul.u32 %v1383, %v1386
        %v1389 = vmul.u32 %v1384, %v1385
        %v1390 = vmul.u32 %v1384, %v1386
        %v1391 = vshll.u32 %v1388, 16
        %v1392 = vshrl.u32 %v1388, 16
        %v1393 = vshll.u32 %v1389, 16
        %v1394 = vshrl.u32 %v1389, 16
        %vm1395 = vc.u32 %v1387, %v1391
        %v1396 = vsel %vm1395, 1, 0
        %v1397 = vadd.s32 %v1387, %v1391
        %v1398 = vadd.s32 %v1390, %v1396
        %vm1399 = vc.u32 %v1397, %v1393
        %v1400 = vsel %vm1399, 1, 0
        %v1401 = vadd.s32 %v1397, %v1393
        %v1402 = vadd.s32 %v1398, %v1400
        %v1403 = vadd.s32 %v1402, %v1392
        %v1404 = vadd.s32 %v1403, %v1394
        %v1405 = vand.u32 %v1382, 65535
        %v1406 = vshrl.u32 %v1382, 16
        %v1407 = vand.u32 %v1377, 65535
        %v1408 = vshrl.u32 %v1377, 16
        %v1409 = vmul.u32 %v1405, %v1407
        %v1410 = vmul.u32 %v1405, %v1408
        %v1411 = vmul.u32 %v1406, %v1407
        %v1412 = vmul.u32 %v1406, %v1408
        %v1413 = vshll.u32 %v1410, 16
        %v1414 = vshrl.u32 %v1410, 16
        %v1415 = vshll.u32 %v1411, 16
        %v1416 = vshrl.u32 %v1411, 16
        %vm1417 = vc.u32 %v1409, %v1413
        %v1418 = vsel %vm1417, 1, 0
        %v1419 = vadd.s32 %v1409, %v1413
        %v1420 = vadd.s32 %v1412, %v1418
        %vm1421 = vc.u32 %v1419, %v1415
        %v1422 = vsel %vm1421, 1, 0
        %v1423 = vadd.s32 %v1419, %v1415
        %v1424 = vadd.s32 %v1420, %v1422
        %v1425 = vadd.s32 %v1424, %v1414
        %v1426 = vadd.s32 %v1425, %v1416
        %v1427 = vmul.u32 %v1382, %v1373
        %v1428 = vadd.s32 %v1404, %v1423
        %vm1429 = vc.u32 %v1404, %v1423
        %v1430 = vadd.s32 %v1426, 1
        %v1431 = vsel %vm1429, %v1430, %v1426
        %v1432 = vadd.s32 %v1427, %v1431
        %v1433 = vadd.s32 %v1432, 536870912
        %v1434 = vshrl.u32 %v1433, 30
        %v1435 = vshll.u32 %v1434, 30
        %v1436 = vsub.s32 %v1432, %v1435
        %vm1437 = vcmp.lt.s32.totalorder %v1436, 0
        %v1438 = vsub.s32 0, %v1436
        %v1439 = vsel %vm1437, %v1438, %v1436
        %v1440 = vclz %v1439
        %v1441 = vsub.s32 %v1440, 2
        %vm1442 = vcmp.gt.s32.totalorder 0, %v1441
        %v1443 = vsel %vm1442, 0, %v1441
        %v1444 = vsub.s32 32, %v1443
        %v1445 = vshll.u32 %v1436, %v1443
        %v1446 = vshrl.u32 %v1428, %v1444
        %v1447 = vor.u32 %v1445, %v1446
        %v1448 = vsub.s32 4294967266, %v1443
        %v1449 = vadd.s32 %v1448, 127
        %v1450 = vshll.u32 %v1449, 23
        %v1451 = vor.u32 4788187, %v1450
        %v1452 = vand.u32 2147483647, %v1451
        %v1454 = vcvt.s32.f32 %v1447
        %v1455 = vmul.f32 %v1454, %v1452
        %v1456 = vxor.u32 %v1455, 2147483648
        %v1457 = vsel %vm1336, %v1456, %v1455
        %v1458 = vsub.s32 4, %v1434
        %v1459 = vsel %vm1336, %v1458, %v1434
        %v1460 = vsel %vm1335, %v250, %v1457
        %v1461 = vsel %vm1335, 0, %v1459
        %v1462 = vmul.f32 %v1460, %v1460
        %v1463 = vmul.f32 %v1462, -0.001358992
        %v1464 = vadd.f32 %v1463, 0.041655596
        %v1465 = vmul.f32 %v1462, %v1464
        %v1466 = vadd.f32 %v1465, -0.4999988
        %v1467 = vmul.f32 %v1462, %v1466
        %v1468 = vadd.f32 1.0, %v1467
        %v1469 = vmul.f32 %v1460, %v1460
        %v1470 = vmul.f32 %v1469, -0.00019511016
        %v1471 = vadd.f32 %v1470, 0.008332121
        %v1472 = vmul.f32 %v1469, %v1471
        %v1473 = vadd.f32 %v1472, -0.16666654
        %v1474 = vmul.f32 %v1469, %v1473
        %v1475 = vadd.f32 %v1474, 1.0
        %v1476 = vmul.f32 %v1475, %v1460
        %vm1477 = vweird.f32 %v250
        %v1478 = vadd.s32 %v1461, 3
        %v1479 = vand.u32 %v1478, 3
        %vm1480 = vcmp.lt.s32.totalorder %v1479, 2
        %vm1481 = vcmp.eq.s32.totalorder %v1479, 0
        %v1482 = vxor.u32 %v1476, 2147483648
        %v1483 = vsel %vm1481, %v1468, %v1482
        %vm1484 = vcmp.eq.s32.totalorder %v1479, 2
        %v1485 = vxor.u32 %v1468, 2147483648
        %v1486 = vsel %vm1484, %v1485, %v1476
        %v1487 = vsel %vm1480, %v1483, %v1486
        %v1488 = vsel %vm1477, nan, %v1487
        %v1489 = vsel %vm252, 1, 0
        %vm1490 = vcmp.eq.s32.totalorder %v1489, 1
        %v1491 = vsel %vm1490, %v406, %v1023
        %v1492 = vsel %vm1490, %v560, %v1178
        %v1493 = vsel %vm1490, %v714, %v1333
        %v1494 = vsel %vm1490, %v868, %v1488
        %v1495 = vld [vmem:[%s211] sm:$0x3]
        %v1496 = vld [vmem:[%s211 + $0x2] sm:$0x3]
        %v1497 = vld [vmem:[%s211 + $0x4] sm:$0x3]
        %v1498 = vld [vmem:[%s211 + $0x6] sm:$0x3]
        %v1503 = vperm.slane %v1491, 0
        %v1504 = vperm.slane %v1492, 0
        %v1505 = vperm.slane %v1493, 0
        %v1506 = vperm.slane %v1494, 0
        %v1511 = vadd.f32 %v1495, %v1503
        %v1512 = vadd.f32 %v1496, %v1504
        %v1513 = vadd.f32 %v1497, %v1505
        %v1514 = vadd.f32 %v1498, %v1506
        %vm1515 = vcmask 254976
        %1516 = vst.msk [vmem:[%s234] sm:$0x3] %vm1515, %v1511
        %1517 = vst.msk [vmem:[%s234 + $0x2] sm:$0x3] %vm1515, %v1512
        %1518 = vst.msk [vmem:[%s234 + $0x4] sm:$0x3] %vm1515, %v1513
        %1519 = vst.msk [vmem:[%s234 + $0x6] sm:$0x3] %vm1515, %v1514
        %s1520 = sand.u32 %s111, 1
        %s1521 = scalar_lea.sflag [#allocation4], %s1520
        %s1522 = sand.u32 %s111, 1
        %s1523 = smul.addr %s1522, 8
        %s1524 = scalar_lea.vmem [#allocation8], %s1523
        // Predicated region
        $region45: #{tpu_custom_call.1} parent=31 // pred_check
          %p1525 = pneg %p121
        $region46: #{tpu_custom_call.1} parent=31 // pred_check_branch
          %1527 = sbr.rel (%p1525) target = $region48
        $region47: #{tpu_custom_call.1} parent=31 // pred_region
          %s1528 = smul.u32 4, %s23
          %1530 = vsyncadd %s1521, 0
          %s1531 = sadd.s32 %s24, %s1528
          %s1532 = smul.addr %s1531, 2
          %s1533 = scalar_lea.hbm %s3, %s1532
          %s1534 = sshll.u32 %s1524, 4
          %s1535 = int_to_ptr.vmem [resolvable:$true] %s1534
          %s1536 = sshll.u32 %s1533, 4
          %s1537 = int_to_ptr.hbm [resolvable:$true] %s1536
          %1542 = dma.vmem_to_hbm [thread:$0]  %s1535, 128, %s1537, %s1521, 32, 32, 2
        $region48: #{tpu_custom_call.1} parent=31 // pred_fallthru
          _
      $region32: #{tpu_custom_call.1} parent=5 // pred_fallthru
        _
      %p1543 = scmp.le.s32.totalorder 2, %s14
      // Predicated region
      $region49: #{tpu_custom_call.1} parent=5 // pred_check
        %p1544 = pneg %p1543
      $region50: #{tpu_custom_call.1} parent=5 // pred_check_branch
        %1546 = sbr.rel (%p1544) target = $region52
      $region51: #{tpu_custom_call.1} parent=5 // pred_region
        %s1547 = ssub.s32 %s14, 2
        // Predicated region
        $region53: #{tpu_custom_call.1} parent=51 // pred_check
          %p1548 = pneg %p127
        $region54: #{tpu_custom_call.1} parent=51 // pred_check_branch
          %1550 = sbr.rel (%p1548) target = $region56
        $region55: #{tpu_custom_call.1} parent=51 // pred_region
          %s1551 = sand.u32 %s112, 1
          %s1552 = scalar_lea.sflag [#allocation4], %s1551
          %s1553 = sand.u32 %s112, 1
          %s1554 = smul.addr %s1553, 8
          %s1555 = scalar_lea.vmem [#allocation8], %s1554
          %1557 = dma.done %s1552, 128
        $region56: #{tpu_custom_call.1} parent=51 // pred_fallthru
          _
      $region52: #{tpu_custom_call.1} parent=5 // pred_fallthru
        _
    $region6: #{tpu_custom_call.1} parent=1 // loop_footer
      %s18 = sadd.s32 1, %s14
    $region7: #{tpu_custom_call.1} parent=1 // loop_footer_branch
      %13 = sbr.rel target = $region3
    $region8: #{tpu_custom_call.1} parent=1 // loop_exit
      _
    %1558 = vsyncpa [#allocation3], 1
    %s1559 = scalar_lea.sflag [#allocation3], 1
    %1560 = vsyncpa %s1559, 1
    %1561 = vsyncpa [#allocation6], 1
    %1562 = vsyncpa [#allocation4], 1
    %s1563 = scalar_lea.sflag [#allocation4], 1
    %1564 = vsyncpa %s1563, 1

</llo_original>
